<compile_context>
chip_gen: v7x
topology: tpu7x:2x2x1
jax: 0.10.0
libtpu: 0.0.40
codegen_flags: <defaults>
</compile_context>

<pallas_src>
import functools
import math

import jax
import jax.numpy as jnp
from jax.experimental import pallas as pl
from jax.experimental.pallas import tpu as pltpu


_LANE_CANDIDATES = (1024, 512, 256, 128)   # lane-dense flattenings, tried in order
_PAD_LANES = 1024                          # fallback-path lane count
_TARGET_BLOCK_BYTES = 4 * 1024 * 1024      # ~4 MiB per input buffer (safe on v7x VMEM)
_VMEM_LIMIT_BYTES = 32 * 1024 * 1024       # explicit: v5e's default scoped VMEM is 16 MiB


def _sublane_multiple(dtype) -> int:
    # Native sublane packing: f32 -> 8, bf16/f16 -> 16, int8/fp8 -> 32.
    return max(8, 32 // jnp.dtype(dtype).itemsize)


def _choose_layout(shape, dtype):
    """Pick a free (bitcast) 2-D view (rows, lanes) of x; pad only as last resort."""
    n = int(math.prod(shape)) if shape else 1
    itemsize = jnp.dtype(dtype).itemsize
    # 1) lane-dense flattening with no padding.
    for lanes in _LANE_CANDIDATES:
        if n >= lanes and n % lanes == 0:
            return n, lanes, n // lanes, False
    # 2) natural trailing dim as lanes (free collapse of leading dims).  The
    #    guard keeps even the minimal legal block inside the byte budget.
    if len(shape) >= 2 and shape[-1] >= 1 and shape[-1] * itemsize * 32 <= _TARGET_BLOCK_BYTES:
        lanes = shape[-1]
        return n, lanes, n // lanes, False
    # 3) fallback: pad to (rows, 1024).  Costs extra HBM passes; rare shapes only.
    return n, _PAD_LANES, pl.cdiv(n, _PAD_LANES), True


def _choose_block_rows(rows, lanes, dtype):
    """Byte-sized tiles: ~4 MiB per buffer, rounded to the dtype sublane multiple."""
    itemsize = jnp.dtype(dtype).itemsize
    row_bytes = lanes * itemsize
    if rows * row_bytes <= _TARGET_BLOCK_BYTES:
        return rows                                    # single block / full rows dim
    sub = _sublane_multiple(dtype)
    block_rows = (_TARGET_BLOCK_BYTES // row_bytes) // sub * sub
    return max(sub, block_rows)


def _locked_dropout_kernel(seed_ref, x_ref, y_ref, *, keep_thresh, inv_keep,
                           lanes, block_rows):
    """y = locked_bernoulli_mask(seed, global flat index) * inv_keep * x (one tile)."""
    xv = x_ref[...]
    inv = jnp.asarray(inv_keep, dtype=xv.dtype)

    # Static branch: dropout == 0 keeps everything -> exact identity * inv_keep.
    if keep_thresh >= (1 << 32):
        y_ref[...] = xv * inv
        return

    # --- per-element counter + seed ------------------------------------------
    # Scalar-unit work hoisted: one salt carries both the seed mix and this
    # tile's global row offset, so the per-element index math is iota + shift
    # (or mul for non-pow2 lanes) + two adds.
    seed_u = seed_ref[0].astype(jnp.uint32)
    base = jnp.uint32(pl.program_id(0)) * jnp.uint32(block_rows * lanes)
    salt = seed_u * jnp.uint32(0x9E3779B9) + base

    r = jax.lax.broadcasted_iota(jnp.int32, xv.shape, 0)
    c = jax.lax.broadcasted_iota(jnp.int32, xv.shape, 1)
    if lanes & (lanes - 1) == 0:                       # power-of-two lanes -> shift
        local = (r << (lanes.bit_length() - 1)) + c
    else:
        local = r * lanes + c
    h = local.astype(jnp.uint32) + salt

    # --- 2-multiply murmur-style finalizer (VPU only; mask never hits HBM) ---
    h = h * jnp.uint32(0x85EBCA6B)
    h = h ^ (h >> 13)
    h = h * jnp.uint32(0xC2B2AE35)
    h = h ^ (h >> 16)

    # Exact-integer bernoulli(keep_prob): keep iff h < keep_prob * 2^32.
    keep = h < jnp.uint32(keep_thresh)
    y_ref[...] = jnp.where(keep, xv * inv, jnp.asarray(0, dtype=xv.dtype))


@functools.partial(jax.jit, static_argnames=("keep_thresh", "inv_keep"))
def _locked_dropout_call(x, seed, *, keep_thresh, inv_keep):
    orig_shape = x.shape
    n, lanes, rows, need_pad = _choose_layout(orig_shape, x.dtype)
    block_rows = _choose_block_rows(rows, lanes, x.dtype)
    grid_rows = pl.cdiv(rows, block_rows)

    if need_pad:
        # TODO(synk): rare fallback (e.g. unaligned 1-D x) still pays extra HBM
        # passes for pad/slice; every shape from this RNN LM hits the free paths.
        flat = jnp.pad(x.reshape(-1), (0, rows * lanes - n))
        x2 = flat.reshape(rows, lanes)
    else:
        x2 = x.reshape(rows, lanes)        # layout-preserving reshape: free

    kernel = functools.partial(
        _locked_dropout_kernel,
        keep_thresh=keep_thresh, inv_keep=inv_keep,
        lanes=lanes, block_rows=block_rows,
    )

    y2 = pl.pallas_call(
        kernel,
        out_shape=jax.ShapeDtypeStruct((rows, lanes), x.dtype),
        grid_spec=pltpu.PrefetchScalarGridSpec(
            num_scalar_prefetch=1,
            grid=(grid_rows,),
            in_specs=[pl.BlockSpec((block_rows, lanes), lambda i, seed_ref: (i, 0))],
            out_specs=pl.BlockSpec((block_rows, lanes), lambda i, seed_ref: (i, 0)),
        ),
        compiler_params=pltpu.CompilerParams(
            dimension_semantics=("parallel",),
            vmem_limit_bytes=_VMEM_LIMIT_BYTES,
        ),
    )(seed, x2)

    if need_pad:
        y2 = y2.reshape(-1)[:n]
    return y2.reshape(orig_shape)


class LockedDropout:
    """JAX/Pallas port of the PyTorch LockedDropout module (forward pass)."""

    def __init__(self, seed=0):
        self.m = None                      # locked mask state: (seed array, sample keep-prob)
        self._base_seed = int(seed)
        self._draws = 0

    def reset_state(self):
        self.m = None

    def __call__(self, x, dropout=0.5, train=True):
        if train == False:                 # noqa: E712  (mirror the original comparison)
            return x
        if self.m is None:
            # "Sample" a fresh locked mask: cache only (seed, sampling keep-prob).
            # The mask is regenerated deterministically in-kernel from the seed and
            # the flat element index, so no mask tensor ever touches HBM.
            # NOTE: like the original, the lock is tied to x's layout at lock time;
            # calling later with a different shape changes which bit each element sees.
            seed = self._base_seed + self._draws
            self._draws += 1
            self.m = (jnp.asarray([seed], dtype=jnp.int32), 1.0 - float(dropout))
        seed_arr, sample_keep = self.m
        cur_keep = 1.0 - float(dropout)          # original divides by the CURRENT (1 - dropout)
        keep_thresh = int(round(sample_keep * 2.0 ** 32))   # == 2^32 -> static keep-all branch
        inv_keep = 1.0 / cur_keep
        return _locked_dropout_call(x, seed_arr,
                                    keep_thresh=keep_thresh, inv_keep=inv_keep)


if __name__ == "__main__":
    key = jax.random.PRNGKey(0)
    seq_len, batch, hidden = 8, 2, 32
    x = jax.random.normal(key, (seq_len, batch, hidden), dtype=jnp.float32)

    drop = LockedDropout(seed=0)
    p = 0.5

    # eval path: identity
    y_eval = jax.block_until_ready(drop(x, dropout=p, train=False))
    assert jnp.allclose(y_eval, x)

    # first training call: sample + apply the locked mask
    y1 = jax.block_until_ready(drop(x, dropout=p, train=True))

    # every element is either dropped (0) or scaled by exactly 1/(1-p)
    scaled = x / (1.0 - p)
    ok_elem = jnp.logical_or(
        jnp.isclose(y1, 0.0, atol=1e-6), jnp.isclose(y1, scaled, rtol=1e-5, atol=1e-6)
    )
    assert bool(jnp.all(ok_elem))

    # mask is neither all-keep nor all-drop
    kept_frac = float(jnp.mean((y1 != 0.0).astype(jnp.float32)))
    assert 0.2 < kept_frac < 0.8, kept_frac

    # second training call: mask is "locked" -> bit-identical result
    y2 = jax.block_until_ready(drop(x, dropout=p, train=True))
    assert bool(jnp.all(y1 == y2))

    # reset_state -> a new mask is drawn
    drop.reset_state()
    y3 = jax.block_until_ready(drop(x, dropout=p, train=True))
    assert not bool(jnp.all(y1 == y3))

    # a second, non-1024-aligned shape exercises the free trailing-dim layout path
    x_b = jax.random.normal(jax.random.PRNGKey(1), (6, 2, 80), dtype=jnp.float32)
    drop_b = LockedDropout(seed=3)
    y_b = jax.block_until_ready(drop_b(x_b, dropout=0.25, train=True))
    ok_b = jnp.logical_or(
        jnp.isclose(y_b, 0.0, atol=1e-6),
        jnp.isclose(y_b, x_b / 0.75, rtol=1e-5, atol=1e-6),
    )
    assert bool(jnp.all(ok_b))

    print("KERNEL_OK")
</pallas_src>

<mosaic_0001>
module attributes {stable_mosaic.version = 11 : i64} {
  func.func @_locked_dropout_kernel(%arg0: i32, %arg1: memref<1xi32, #tpu.memory_space<smem>>, %arg2: memref<1x512xf32, #tpu.memory_space<vmem>>, %arg3: memref<1x512xf32, #tpu.memory_space<vmem>>) attributes {dimension_semantics = [#tpu.dimension_semantics<parallel>], iteration_bounds = array<i64: 1>, scalar_prefetch = 1 : i64, scratch_operands = 0 : i64, tpu.core_type = #tpu.core_type<tc>, window_params = [{transform_indices = @transform_0, window_bounds = array<i64: 1, 512>}, {transform_indices = @transform_1, window_bounds = array<i64: 1, 512>}]} {
    %c0 = arith.constant 0 : index
    %c0_0 = arith.constant 0 : index
    %0 = vector.load %arg2[%c0, %c0_0] : memref<1x512xf32, #tpu.memory_space<vmem>>, vector<1x512xf32>
    %c0_1 = arith.constant 0 : index
    %1 = memref.load %arg1[%c0_1] : memref<1xi32, #tpu.memory_space<smem>>
    %c512_i32 = arith.constant 512 : i32
    %2 = arith.muli %arg0, %c512_i32 : i32
    %c-1640531527_i32 = arith.constant -1640531527 : i32
    %3 = arith.muli %1, %c-1640531527_i32 : i32
    %4 = arith.addi %3, %2 : i32
    %5 = tpu.iota {dimensions = array<i32: 0>} : vector<1x512xi32>
    %6 = tpu.iota {dimensions = array<i32: 1>} : vector<1x512xi32>
    %c9_i32 = arith.constant 9 : i32
    %7 = vector.broadcast %c9_i32 : i32 to vector<1x512xi32>
    %8 = arith.shli %5, %7 : vector<1x512xi32>
    %9 = arith.addi %8, %6 : vector<1x512xi32>
    %10 = vector.broadcast %4 : i32 to vector<1x512xi32>
    %11 = arith.addi %9, %10 : vector<1x512xi32>
    %c-2048144789_i32 = arith.constant -2048144789 : i32
    %12 = vector.broadcast %c-2048144789_i32 : i32 to vector<1x512xi32>
    %13 = arith.muli %11, %12 : vector<1x512xi32>
    %c13_i32 = arith.constant 13 : i32
    %14 = vector.broadcast %c13_i32 : i32 to vector<1x512xi32>
    %15 = arith.shrui %13, %14 : vector<1x512xi32>
    %16 = arith.xori %13, %15 : vector<1x512xi32>
    %c-1028477387_i32 = arith.constant -1028477387 : i32
    %17 = vector.broadcast %c-1028477387_i32 : i32 to vector<1x512xi32>
    %18 = arith.muli %16, %17 : vector<1x512xi32>
    %c16_i32 = arith.constant 16 : i32
    %19 = vector.broadcast %c16_i32 : i32 to vector<1x512xi32>
    %20 = arith.shrui %18, %19 : vector<1x512xi32>
    %21 = arith.xori %18, %20 : vector<1x512xi32>
    %c-2147483648_i32 = arith.constant -2147483648 : i32
    %22 = vector.broadcast %c-2147483648_i32 : i32 to vector<1x512xi32>
    %23 = arith.cmpi ult, %21, %22 : vector<1x512xi32>
    %cst = arith.constant 2.000000e+00 : f32
    %24 = vector.broadcast %cst : f32 to vector<1x512xf32>
    %25 = arith.mulf %0, %24 : vector<1x512xf32>
    %cst_2 = arith.constant 0.000000e+00 : f32
    %26 = vector.broadcast %cst_2 : f32 to vector<1x512xf32>
    %27 = arith.select %23, %25, %26 : vector<1x512xi1>, vector<1x512xf32>
    %c0_3 = arith.constant 0 : index
    %c0_4 = arith.constant 0 : index
    %28 = vector.load %arg3[%c0_3, %c0_4] : memref<1x512xf32, #tpu.memory_space<vmem>>, vector<1x512xf32>
    tpu.vector_store %arg3[%c0_3, %c0_4], %27 {strides = array<i32>} : memref<1x512xf32, #tpu.memory_space<vmem>>, vector<1x512xf32>,
    return
  }
  func.func @transform_0(%arg0: i32, %arg1: memref<1xi32, #tpu.memory_space<smem>>) -> (i32, i32) {
    %c0_i32 = arith.constant 0 : i32
    %c0_i32_0 = arith.constant 0 : i32
    return %arg0, %c0_i32 : i32, i32
  }
  func.func @transform_1(%arg0: i32, %arg1: memref<1xi32, #tpu.memory_space<smem>>) -> (i32, i32) {
    %c0_i32 = arith.constant 0 : i32
    %c0_i32_0 = arith.constant 0 : i32
    return %arg0, %c0_i32 : i32, i32
  }
}

</mosaic_0001>

<llo_original>
// kernel: _locked_dropout_call.1
$region0: #{_locked_dropout_call.1}
  #allocation0 [shape = 'u32[]', space=smem, size = 0x4, offset = 0x4, fixed_abs, tag = 'smem constant byte address 0x4 - core index']
  #allocation1 [shape = 'u32[144,128]{1,0:T(1,128)}', space=vmem, size = 0x12000, scoped, tag = 'internal scratch']
  #allocation2 [shape = 's32[1]{0}', space=sflag, size = 0x4, scoped, tag = 'scoped memory for _locked_dropout_call.1']
  #allocation3 [shape = 's32[1]{0:T(128)S(6)}', space=smem, size = 0x200, scoped, tag = 'prefetched SMEM operand 0']
  %s0 = inlined_call_operand.<no memory space> [shape: s32[1], index: 0, kind: input, shape index: {}]
  %s1 = inlined_call_operand.vmem [shape: f32[1,512], index: 1, kind: input, shape index: {}]
  %s2 = inlined_call_operand.vmem [shape: f32[1,512], index: 2, kind: output, shape index: {}]
  %s3 = sld [smem:[#allocation0]]
  $region14: #{_locked_dropout_call.1} parent=0
    _
  %s5 = ssub.s32 1, %s3
  %s6 = scalar_select 0, %s5, %s3
  %7 = sst [smem:[#allocation3]] %s0
  // Predicated region
  $region2: #{_locked_dropout_call.1} parent=0 // pred_check
    _
  $region3: #{_locked_dropout_call.1} parent=0 // pred_check_branch
    %9 = sbr.rel (0) target = $region5
  $region4: #{_locked_dropout_call.1} parent=0 // pred_region
    _
  $region5: #{_locked_dropout_call.1} parent=0 // pred_fallthru
    _
  %v10 = vld [vmem:[%s1] sm:$0xf]
  %s11 = sld [smem:[#allocation3]]
  %s12 = smul.u32 0, 512
  %s13 = smul.u32 %s11, 2654435769
  %s14 = sadd.s32 %s13, %s12
  %v15 = vlaneseq
  %v16 = vshrl.u32 %v15, 7
  %v17 = vlaneseq
  %v18 = vand.u32 %v17, 127
  %v19 = vadd.s32 %v18, 128
  %v20 = vadd.s32 %v18, 256
  %v21 = vadd.s32 %v18, 384
  %v22 = vshll.u32 %v16, 9
  %v23 = vadd.s32 %v22, %v18
  %v24 = vadd.s32 %v22, %v19
  %v25 = vadd.s32 %v22, %v20
  %v26 = vadd.s32 %v22, %v21
  %v27 = vstv %s14
  %v28 = vadd.s32 %v23, %v27
  %v29 = vadd.s32 %v24, %v27
  %v30 = vadd.s32 %v25, %v27
  %v31 = vadd.s32 %v26, %v27
  %v32 = vmul.u32 %v28, 2246822507
  %v33 = vmul.u32 %v29, 2246822507
  %v34 = vmul.u32 %v30, 2246822507
  %v35 = vmul.u32 %v31, 2246822507
  %v36 = vshrl.u32 %v32, 13
  %v37 = vshrl.u32 %v33, 13
  %v38 = vshrl.u32 %v34, 13
  %v39 = vshrl.u32 %v35, 13
  %v40 = vxor.u32 %v32, %v36
  %v41 = vxor.u32 %v33, %v37
  %v42 = vxor.u32 %v34, %v38
  %v43 = vxor.u32 %v35, %v39
  %v44 = vmul.u32 %v40, 3266489909
  %v45 = vmul.u32 %v41, 3266489909
  %v46 = vmul.u32 %v42, 3266489909
  %v47 = vmul.u32 %v43, 3266489909
  %v48 = vshrl.u32 %v44, 16
  %v49 = vshrl.u32 %v45, 16
  %v50 = vshrl.u32 %v46, 16
  %v51 = vshrl.u32 %v47, 16
  %v52 = vxor.u32 %v44, %v48
  %v53 = vxor.u32 %v45, %v49
  %v54 = vxor.u32 %v46, %v50
  %v55 = vxor.u32 %v47, %v51
  %vm56 = vcmp.lt.u32.totalorder %v52, 2147483648
  %vm57 = vcmp.lt.u32.totalorder %v53, 2147483648
  %vm58 = vcmp.lt.u32.totalorder %v54, 2147483648
  %vm59 = vcmp.lt.u32.totalorder %v55, 2147483648
  %v60 = vmul.f32 %v10, 2.0
  %v62 = vlaneseq
  %v63 = vshrl.u32 %v62, 7
  %v64 = vsub.s32 0, %v63
  %v65 = vrot.slane %v60, %v64
  %v66 = vlaneseq
  %v67 = vshrl.u32 %v66, 7
  %v68 = vsub.s32 1, %v67
  %v69 = vrot.slane %v60, %v68
  %v70 = vlaneseq
  %v71 = vshrl.u32 %v70, 7
  %v72 = vsub.s32 2, %v71
  %v73 = vrot.slane %v60, %v72
  %v74 = vlaneseq
  %v75 = vshrl.u32 %v74, 7
  %v76 = vsub.s32 3, %v75
  %v77 = vrot.slane %v60, %v76
  %v82 = vsel %vm56, %v65, 0.0
  %v83 = vsel %vm57, %v69, 0.0
  %v84 = vsel %vm58, %v73, 0.0
  %v85 = vsel %vm59, %v77, 0.0
  %v90 = vcombine.low %v82, %v83
  %v91 = vcombine.low %v84, %v85
  %v93 = vunpack.c.l.s4 1966171168
  %v94 = vunpack.c.0.s8 %v93
  %v95 = vlaneseq
  %v96 = vshrl.u32 %v95, 7
  %v97 = vsub.s32 %v94, %v96
  %v98 = vrot.slane %v90, %v97
  %v100 = vunpack.c.l.s4 1966171168
  %v101 = vunpack.c.0.s8 %v100
  %v102 = vlaneseq
  %v103 = vshrl.u32 %v102, 7
  %v104 = vsub.s32 %v101, %v103
  %v105 = vrot.slane %v91, %v104
  %v106 = vcombine.low %v98, %v105
  %v108 = vunpack.c.l.s4 1966171168
  %v109 = vunpack.c.0.s8 %v108
  %v110 = vlaneseq
  %v111 = vshrl.u32 %v110, 7
  %v112 = vsub.s32 %v109, %v111
  %v113 = vrot.slane %v106, %v112
  %v115 = vlaneseq
  %vm116 = vcmp.ge.s32.totalorder %v115, 0
  %vm117 = vcmp.lt.s32.totalorder %v115, 512
  %vm118 = vmand %vm116, %vm117
  %119 = vst.msk [vmem:[%s2] sm:$0xf] %vm118, %v113
  // Predicated region
  $region6: #{_locked_dropout_call.1} parent=0 // pred_check
    _
  $region7: #{_locked_dropout_call.1} parent=0 // pred_check_branch
    %121 = sbr.rel (0) target = $region9
  $region8: #{_locked_dropout_call.1} parent=0 // pred_region
    _
  $region9: #{_locked_dropout_call.1} parent=0 // pred_fallthru
    _
  // Predicated region
  $region10: #{_locked_dropout_call.1} parent=0 // pred_check
    _
  $region11: #{_locked_dropout_call.1} parent=0 // pred_check_branch
    %123 = sbr.rel (0) target = $region13
  $region12: #{_locked_dropout_call.1} parent=0 // pred_region
    _
  $region13: #{_locked_dropout_call.1} parent=0 // pred_fallthru
    _

</llo_original>
